<compile_context>
chip_gen: v7x
topology: tpu7x:2x2x1
jax: 0.10.0
libtpu: 0.0.40
codegen_flags: <defaults>
</compile_context>

<pallas_src>
import functools

import jax
import jax.numpy as jnp
from jax.experimental import pallas as pl
from jax.experimental.pallas import tpu as pltpu


def _field_effect_kernel(d_ref, f_ref, out_ref, *, coeff, num_steps):
    # d_ref:   (1,) f32 in SMEM  -- the learned diffusion coefficient D
    # f_ref:   (H, W) f32 in VMEM (one batch element; batch dim squeezed)
    # out_ref: (H, W) f32 in VMEM
    H, W = f_ref.shape

    # Fold D * dt / dx^2 into a single scalar (coeff = dt/dx^2 is static), so
    # the epilogue is one broadcast-mul + one add per element per step.
    c = d_ref[0] * coeff

    def step(f):
        lap = (
            pltpu.roll(f, 1, axis=0)
            + pltpu.roll(f, H - 1, axis=0)   # == roll(f, -1, axis=0)
            + pltpu.roll(f, 1, axis=1)
            + pltpu.roll(f, W - 1, axis=1)   # == roll(f, -1, axis=1)
            - 4.0 * f
        )
        return f + c * lap

    if num_steps == 1:
        out_ref[...] = step(f_ref[...])
    else:
        out_ref[...] = jax.lax.fori_loop(
            0, num_steps, lambda _, f: step(f), f_ref[...],
            unroll=min(int(num_steps), 8),
        )


def field_effect_forward(field_effect, D, dt=0.01, dx=1.0, num_steps=1):
    """Pallas equivalent of FieldEffectModel.forward.

    field_effect: (H, W) or (B, H, W) float32 periodic grid(s)
    D:            scalar float32 (the nn.Parameter)
    dt, dx:       python floats (static constants, as in the reference)
    num_steps:    number of fused diffusion steps (1 == reference forward)
    """
    field_effect = jnp.asarray(field_effect, dtype=jnp.float32)
    squeeze = field_effect.ndim == 2
    if squeeze:
        field_effect = field_effect[None]
    B, H, W = field_effect.shape

    d_arr = jnp.asarray(D, dtype=jnp.float32).reshape(1)

    kernel = functools.partial(
        _field_effect_kernel,
        coeff=float(dt) / (float(dx) * float(dx)),
        num_steps=int(num_steps),
    )

    out = pl.pallas_call(
        kernel,
        out_shape=jax.ShapeDtypeStruct((B, H, W), jnp.float32),
        grid=(B,),
        in_specs=[
            # D: whole (1,) array resident in SMEM (no tiling, no padding).
            pl.BlockSpec(memory_space=pltpu.SMEM),
            # one whole (H, W) field per grid step; batch dim squeezed out.
            pl.BlockSpec((None, H, W), lambda b: (b, 0, 0)),
        ],
        out_specs=pl.BlockSpec((None, H, W), lambda b: (b, 0, 0)),
        compiler_params=pltpu.CompilerParams(
            dimension_semantics=("parallel",),   # shards batch across TCs (v7x)
        ),
        cost_estimate=pl.CostEstimate(
            flops=7 * B * H * W * int(num_steps),
            bytes_accessed=2 * B * H * W * 4,
            transcendentals=0,
        ),
    )(d_arr, field_effect)

    return out[0] if squeeze else out


if __name__ == "__main__":
    key = jax.random.PRNGKey(0)

    B, H, W = 2, 16, 128     # small batch of 2-D field grids
    dt_, dx_ = 0.01, 1.0
    init_D = 0.1             # deterministic parameter init, matching __init__

    fields = jax.random.normal(key, (B, H, W), dtype=jnp.float32)

    # Pure-JAX reference (matches the PyTorch forward).
    def ref_step(f):
        lap = (
            jnp.roll(f, 1, axis=0) + jnp.roll(f, -1, axis=0)
            + jnp.roll(f, 1, axis=1) + jnp.roll(f, -1, axis=1)
            - 4.0 * f
        ) / (dx_ * dx_)
        return f + init_D * lap * dt_

    # 1) batched single step (reference forward applied per field).
    out = jax.block_until_ready(field_effect_forward(fields, init_D, dt=dt_, dx=dx_))
    ref = jax.vmap(ref_step)(fields)
    assert out.shape == (B, H, W) and out.dtype == jnp.float32
    assert jnp.allclose(out, ref, atol=1e-5, rtol=1e-5), "batched step mismatch"

    # 2) single 2-D field, exactly the nn.Module forward signature.
    out2d = jax.block_until_ready(field_effect_forward(fields[0], init_D, dt=dt_, dx=dx_))
    assert out2d.shape == (H, W)
    assert jnp.allclose(out2d, ref_step(fields[0]), atol=1e-5, rtol=1e-5), "2-D step mismatch"

    # 3) fused multi-step diffusion (8 steps inside a single pallas_call).
    n_steps = 8
    out_multi = jax.block_until_ready(
        field_effect_forward(fields, init_D, dt=dt_, dx=dx_, num_steps=n_steps))
    ref_multi = fields
    for _ in range(n_steps):
        ref_multi = jax.vmap(ref_step)(ref_multi)
    assert jnp.allclose(out_multi, ref_multi, atol=1e-5, rtol=1e-5), "multi-step mismatch"

    print("KERNEL_OK")
</pallas_src>

<mosaic_0001>
module attributes {stable_mosaic.version = 11 : i64} {
  func.func @_field_effect_kernel(%arg0: i32, %arg1: memref<1xf32, #tpu.memory_space<smem>>, %arg2: memref<1x16x128xf32, #tpu.memory_space<vmem>>, %arg3: memref<1x16x128xf32, #tpu.memory_space<vmem>>) attributes {dimension_semantics = [#tpu.dimension_semantics<parallel>], iteration_bounds = array<i64: 2>, scalar_prefetch = 0 : i64, scratch_operands = 0 : i64, tpu.core_type = #tpu.core_type<tc>, window_params = [{transform_indices = @transform_0, window_bounds = array<i64: 1>}, {transform_indices = @transform_1, window_bounds = array<i64: 1, 16, 128>}, {transform_indices = @transform_2, window_bounds = array<i64: 1, 16, 128>}]} {
    %c0 = arith.constant 0 : index
    %0 = memref.load %arg1[%c0] : memref<1xf32, #tpu.memory_space<smem>>
    %cst = arith.constant 0.00999999977 : f32
    %1 = arith.mulf %0, %cst : f32
    %c0_0 = arith.constant 0 : index
    %c0_1 = arith.constant 0 : index
    %c0_2 = arith.constant 0 : index
    %2 = vector.load %arg2[%c0_0, %c0_1, %c0_2] : memref<1x16x128xf32, #tpu.memory_space<vmem>>, vector<1x16x128xf32>
    %3 = vector.shape_cast %2 : vector<1x16x128xf32> to vector<16x128xf32>
    %c1_i32 = arith.constant 1 : i32
    %4 = tpu.dynamic_rotate %3 by %c1_i32 dim 0 : vector<16x128xf32>, i32 -> vector<16x128xf32>
    %c15_i32 = arith.constant 15 : i32
    %5 = tpu.dynamic_rotate %3 by %c15_i32 dim 0 : vector<16x128xf32>, i32 -> vector<16x128xf32>
    %6 = arith.addf %4, %5 : vector<16x128xf32>
    %c1_i32_3 = arith.constant 1 : i32
    %7 = tpu.dynamic_rotate %3 by %c1_i32_3 dim 1 : vector<16x128xf32>, i32 -> vector<16x128xf32>
    %8 = arith.addf %6, %7 : vector<16x128xf32>
    %c127_i32 = arith.constant 127 : i32
    %9 = tpu.dynamic_rotate %3 by %c127_i32 dim 1 : vector<16x128xf32>, i32 -> vector<16x128xf32>
    %10 = arith.addf %8, %9 : vector<16x128xf32>
    %cst_4 = arith.constant 4.000000e+00 : f32
    %11 = vector.broadcast %cst_4 : f32 to vector<16x128xf32>
    %12 = arith.mulf %11, %3 : vector<16x128xf32>
    %13 = arith.subf %10, %12 : vector<16x128xf32>
    %14 = vector.broadcast %1 : f32 to vector<16x128xf32>
    %15 = arith.mulf %14, %13 : vector<16x128xf32>
    %16 = arith.addf %3, %15 : vector<16x128xf32>
    %c0_5 = arith.constant 0 : index
    %c0_6 = arith.constant 0 : index
    %c0_7 = arith.constant 0 : index
    %17 = vector.load %arg3[%c0_5, %c0_6, %c0_7] : memref<1x16x128xf32, #tpu.memory_space<vmem>>, vector<1x16x128xf32>
    %18 = vector.shape_cast %17 : vector<1x16x128xf32> to vector<16x128xf32>
    %19 = vector.shape_cast %16 : vector<16x128xf32> to vector<1x16x128xf32>
    tpu.vector_store %arg3[%c0_5, %c0_6, %c0_7], %19 {strides = array<i32>} : memref<1x16x128xf32, #tpu.memory_space<vmem>>, vector<1x16x128xf32>,
    return
  }
  func.func @transform_0(%arg0: i32) -> i32 {
    %c0_i32 = arith.constant 0 : i32
    %c0_i32_0 = arith.constant 0 : i32
    return %c0_i32 : i32
  }
  func.func @transform_1(%arg0: i32) -> (i32, i32, i32) {
    %c0_i32 = arith.constant 0 : i32
    %c0_i32_0 = arith.constant 0 : i32
    %c0_i32_1 = arith.constant 0 : i32
    return %arg0, %c0_i32, %c0_i32_0 : i32, i32, i32
  }
  func.func @transform_2(%arg0: i32) -> (i32, i32, i32) {
    %c0_i32 = arith.constant 0 : i32
    %c0_i32_0 = arith.constant 0 : i32
    %c0_i32_1 = arith.constant 0 : i32
    return %arg0, %c0_i32, %c0_i32_0 : i32, i32, i32
  }
}

</mosaic_0001>

<llo_original>
// kernel: tpu_custom_call.1
$region0: #{tpu_custom_call.1}
  #allocation0 [shape = 'u32[]', space=smem, size = 0x4, offset = 0x4, fixed_abs, tag = 'smem constant byte address 0x4 - core index']
  #allocation1 [shape = 'u32[144,128]{1,0:T(1,128)}', space=vmem, size = 0x12000, scoped, tag = 'internal scratch']
  #allocation2 [shape = 'f32[1]{0:T(128)S(6)}', space=smem, size = 0x200, scoped, tag = 'scoped memory for tpu_custom_call.1']
  %s0 = inlined_call_operand.<no memory space> [shape: f32[1], index: 0, kind: input, shape index: {}]
  %s1 = inlined_call_operand.hbm [shape: f32[2,16,128], index: 1, kind: input, shape index: {}]
  %s2 = inlined_call_operand.hbm [shape: f32[2,16,128], index: 2, kind: output, shape index: {}]
  %s3 = sld [smem:[#allocation0]]
  $region45: #{tpu_custom_call.1} parent=0
    _
  %s5 = ssub.s32 1, %s3
  %s6 = scalar_select 0, %s5, %s3
  %7 = sst [smem:[#allocation2]] %s0
  $region1: #{tpu_custom_call.1} parent=0
    #allocation3 [shape = 'u8[16384]{0}', space=vmem, size = 0x4000, scoped, tag = 'input window, operand 1']
    #allocation4 [shape = 's32[2]{0}', space=sflag, size = 0x8, scoped, tag = 'scoped memory for tpu_custom_call.1']
    #allocation5 [shape = 's32[2]{0}', space=sflag, size = 0x8, scoped, tag = 'scoped memory for tpu_custom_call.1']
    #allocation6 [shape = 'u8[16384]{0}', space=vmem, size = 0x4000, scoped, tag = 'output window, operand 0']
    %8 = vsyncpa [#allocation4], 0
    %s9 = scalar_lea.sflag [#allocation4], 1
    %10 = vsyncpa %s9, 0
    %11 = vsyncpa [#allocation5], 0
    %s12 = scalar_lea.sflag [#allocation5], 1
    %13 = vsyncpa %s12, 0
    loop: start=0, step=1, limit=4
    $region2: #{tpu_custom_call.1} parent=1 // loop_pre_header
      _
    $region3: #{tpu_custom_call.1} parent=1 // loop_header
      %s15 = sphi 0, %s19
      %p16 = scmp.ge.s32.totalorder %s15, 4
      %s23 = sphi 0, %s23
      %s25 = sphi 0, %s23
      %s26 = sphi 0, %s25
      %s40 = sphi 0, %s26
      %s46 = sphi 0, %s48
      %s49 = sphi 0, %s46
      %s50 = sphi 0, %s49
      %s66 = sphi 0, %s50
      %s72 = sphi 0, %s74
      %s75 = sphi 0, %s72
      %s76 = sphi 0, %s75
      %s92 = sphi 0, %s76
    $region4: #{tpu_custom_call.1} parent=1 // loop_header_branch
      %18 = sbr.rel (%p16) target = $region8
    $region5: #{tpu_custom_call.1} parent=1 // loop_body
      %s20 = ssub.s32 %s15, 1
      %s21 = ssub.s32 %s15, 2
      %s22 = sadd.s32 %s15, 1
      %s24 = sadd.s32 %s23, 1
      %p27 = scmp.eq.s32.totalorder %s15, 1
      %p28 = scmp.ne.s32.totalorder %s23, %s25
      %p29 = scmp.eq.s32.totalorder %s15, 0
      %p30 = por %p28, %p29
      %p31 = scmp.ne.s32.totalorder %s23, %s25
      %p32 = scmp.eq.s32.totalorder %s20, 1
      %p33 = por %p31, %p32
      %p34 = scmp.ne.s32.totalorder %s25, %s26
      %p35 = scmp.eq.s32.totalorder %s20, 0
      %p36 = por %p34, %p35
      %p37 = scmp.ne.s32.totalorder %s25, %s26
      %p38 = scmp.eq.s32.totalorder %s21, 1
      %p39 = por %p37, %p38
      %p41 = scmp.ne.s32.totalorder %s26, %s40
      %p42 = scmp.eq.s32.totalorder %s21, 0
      %p43 = por %p41, %p42
      %s44 = ssub.s32 %s15, %s22
      %p45 = scmp.eq.s32.totalorder %s44, 0
      %s47 = sadd.s32 %s46, 1
      %s48 = scalar_select %p45, %s46, %s47
      %p51 = pneg %p45
      %p52 = scmp.eq.s32.totalorder %s15, 1
      %p53 = por %p51, %p52
      %p54 = scmp.ne.s32.totalorder %s46, %s49
      %p55 = scmp.eq.s32.totalorder %s15, 0
      %p56 = por %p54, %p55
      %p57 = scmp.ne.s32.totalorder %s46, %s49
      %p58 = scmp.eq.s32.totalorder %s20, 1
      %p59 = por %p57, %p58
      %p60 = scmp.ne.s32.totalorder %s49, %s50
      %p61 = scmp.eq.s32.totalorder %s20, 0
      %p62 = por %p60, %p61
      %p63 = scmp.ne.s32.totalorder %s49, %s50
      %p64 = scmp.eq.s32.totalorder %s21, 1
      %p65 = por %p63, %p64
      %p67 = scmp.ne.s32.totalorder %s50, %s66
      %p68 = scmp.eq.s32.totalorder %s21, 0
      %p69 = por %p67, %p68
      %s70 = ssub.s32 %s15, %s22
      %p71 = scmp.eq.s32.totalorder %s70, 0
      %s73 = sadd.s32 %s72, 1
      %s74 = scalar_select %p71, %s72, %s73
      %p77 = pneg %p71
      %p78 = scmp.eq.s32.totalorder %s15, 1
      %p79 = por %p77, %p78
      %p80 = scmp.ne.s32.totalorder %s72, %s75
      %p81 = scmp.eq.s32.totalorder %s15, 0
      %p82 = por %p80, %p81
      %p83 = scmp.ne.s32.totalorder %s72, %s75
      %p84 = scmp.eq.s32.totalorder %s20, 1
      %p85 = por %p83, %p84
      %p86 = scmp.ne.s32.totalorder %s75, %s76
      %p87 = scmp.eq.s32.totalorder %s20, 0
      %p88 = por %p86, %p87
      %p89 = scmp.ne.s32.totalorder %s75, %s76
      %p90 = scmp.eq.s32.totalorder %s21, 1
      %p91 = por %p89, %p90
      %p93 = scmp.ne.s32.totalorder %s76, %s92
      %p94 = scmp.eq.s32.totalorder %s21, 0
      %p95 = por %p93, %p94
      %p96 = scmp.le.s32.totalorder 1, %s15
      %p97 = scmp.lt.s32.totalorder %s15, 3
      %p98 = pnand %p96, %p97
      %p99 = pneg %p98
      // Predicated region
      $region9: #{tpu_custom_call.1} parent=5 // pred_check
        _
      $region10: #{tpu_custom_call.1} parent=5 // pred_check_branch
        %101 = sbr.rel (%p98) target = $region12
      $region11: #{tpu_custom_call.1} parent=5 // pred_region
        %s102 = ssub.s32 %s15, 1
        // Predicated region
        $region13: #{tpu_custom_call.1} parent=11 // pred_check
          %p103 = pneg %p36
        $region14: #{tpu_custom_call.1} parent=11 // pred_check_branch
          %105 = sbr.rel (%p103) target = $region16
        $region15: #{tpu_custom_call.1} parent=11 // pred_region
          _
        $region16: #{tpu_custom_call.1} parent=11 // pred_fallthru
          _
      $region12: #{tpu_custom_call.1} parent=5 // pred_fallthru
        _
      %p106 = scmp.lt.s32.totalorder %s15, 2
      // Predicated region
      $region17: #{tpu_custom_call.1} parent=5 // pred_check
        %p107 = pneg %p106
      $region18: #{tpu_custom_call.1} parent=5 // pred_check_branch
        %109 = sbr.rel (%p107) target = $region20
      $region19: #{tpu_custom_call.1} parent=5 // pred_region
        // Predicated region
        $region21: #{tpu_custom_call.1} parent=19 // pred_check
          %p110 = pneg %p56
        $region22: #{tpu_custom_call.1} parent=19 // pred_check_branch
          %112 = sbr.rel (%p110) target = $region24
        $region23: #{tpu_custom_call.1} parent=19 // pred_region
          %s113 = sand.u32 %s46, 1
          %s114 = scalar_lea.sflag [#allocation4], %s113
          %s115 = sand.u32 %s46, 1
          %s116 = smul.addr %s115, 16
          %s117 = scalar_lea.vmem [#allocation3], %s116
          %s119 = ssub.s32 256, 256
          %120 = vsyncadd %s114, %s119
          %s121 = smul.addr %s15, 2
          %s122 = smul.addr %s121, 128
          %s123 = scalar_lea.hbm %s1, %s122
          %s124 = sshll.u32 %s117, 4
          %s125 = int_to_ptr.vmem [resolvable:$true] %s124
          %130 = dma.hbm_to_vmem [thread:$0]  %s123, 256, %s125, %s114, 128, 128, 8
        $region24: #{tpu_custom_call.1} parent=19 // pred_fallthru
          _
      $region20: #{tpu_custom_call.1} parent=5 // pred_fallthru
        _
      %p131 = scmp.le.s32.totalorder 1, %s15
      %p132 = scmp.lt.s32.totalorder %s15, 3
      %p133 = pnand %p131, %p132
      %p134 = pneg %p133
      // Predicated region
      $region25: #{tpu_custom_call.1} parent=5 // pred_check
        _
      $region26: #{tpu_custom_call.1} parent=5 // pred_check_branch
        %136 = sbr.rel (%p133) target = $region28
      $region27: #{tpu_custom_call.1} parent=5 // pred_region
        %s137 = ssub.s32 %s15, 1
        %s138 = sand.u32 %s49, 1
        %s139 = scalar_lea.sflag [#allocation4], %s138
        %s140 = sand.u32 %s49, 1
        %s141 = smul.addr %s140, 16
        %s142 = scalar_lea.vmem [#allocation3], %s141
        // Predicated region
        $region29: #{tpu_custom_call.1} parent=27 // pred_check
          %p143 = pneg %p62
        $region30: #{tpu_custom_call.1} parent=27 // pred_check_branch
          %145 = sbr.rel (%p143) target = $region32
        $region31: #{tpu_custom_call.1} parent=27 // pred_region
          %146 = dma.done %s139, 256
        $region32: #{tpu_custom_call.1} parent=27 // pred_fallthru
          _
        %p147 = pneg %p36
        %p148 = pneg %p33
        %s149 = sand.u32 %s49, 1
        %s150 = scalar_lea.sflag [#allocation4], %s149
        %s151 = sand.u32 %s49, 1
        %s152 = smul.addr %s151, 16
        %s153 = scalar_lea.vmem [#allocation3], %s152
        %p154 = pneg %p62
        %p155 = pneg %p59
        %p156 = pneg %p88
        %p157 = pneg %p85
        %s158 = sand.u32 %s75, 1
        %s159 = scalar_lea.sflag [#allocation5], %s158
        %s160 = sand.u32 %s75, 1
        %s161 = smul.addr %s160, 16
        %s162 = scalar_lea.vmem [#allocation6], %s161
        %s163 = sld [smem:[#allocation2]]
        %s164 = smul.f32 %s163, 0.01
        %v165 = vld [vmem:[%s142] sm:$0xff]
        %v166 = vld [vmem:[%s142 + $0x8] sm:$0xff]
        %v167 = vrot.slane %v165, 7
        %v168 = vrot.slane %v166, 7
        %v169 = vlaneseq
        %v170 = vshrl.u32 %v169, 7
        %vm171 = vcmp.lt.s32.totalorder %v170, 1
        %v172 = vsel %vm171, %v167, %v168
        %v173 = vsel %vm171, %v168, %v167
        %v174 = vrot.slane %v165, 1
        %v175 = vrot.slane %v166, 1
        %vm176 = vcmp.lt.s32.totalorder %v170, 7
        %v177 = vsel %vm176, %v174, %v175
        %v178 = vsel %vm176, %v175, %v174
        %v179 = vadd.f32 %v173, %v177
        %v180 = vadd.f32 %v172, %v178
        %181 = vrot.lane.b32.xlu0 %v165, 1
        %v182 = vpop.permute.xlu0 %181
        %183 = vrot.lane.b32.xlu0 %v166, 1
        %v184 = vpop.permute.xlu0 %183
        %v185 = vadd.f32 %v179, %v182
        %v186 = vadd.f32 %v180, %v184
        %187 = vrot.lane.b32.xlu0 %v165, 127
        %v188 = vpop.permute.xlu0 %187
        %189 = vrot.lane.b32.xlu0 %v166, 127
        %v190 = vpop.permute.xlu0 %189
        %v191 = vadd.f32 %v185, %v188
        %v192 = vadd.f32 %v186, %v190
        %v193 = vmul.f32 %v165, 4.0
        %v194 = vmul.f32 %v166, 4.0
        %v195 = vsub.f32 %v191, %v193
        %v196 = vsub.f32 %v192, %v194
        %v197 = vstv %s164
        %v198 = vmul.f32 %v197, %v195
        %v199 = vmul.f32 %v197, %v196
        %v200 = vadd.f32 %v165, %v198
        %v201 = vadd.f32 %v166, %v199
        %202 = vst [vmem:[%s162] sm:$0xff] %v200
        %203 = vst [vmem:[%s162 + $0x8] sm:$0xff] %v201
        %s204 = sand.u32 %s75, 1
        %s205 = scalar_lea.sflag [#allocation5], %s204
        %s206 = sand.u32 %s75, 1
        %s207 = smul.addr %s206, 16
        %s208 = scalar_lea.vmem [#allocation6], %s207
        // Predicated region
        $region33: #{tpu_custom_call.1} parent=27 // pred_check
          %p209 = pneg %p85
        $region34: #{tpu_custom_call.1} parent=27 // pred_check_branch
          %211 = sbr.rel (%p209) target = $region36
        $region35: #{tpu_custom_call.1} parent=27 // pred_region
          %s213 = ssub.s32 256, 256
          %214 = vsyncadd %s205, %s213
          %s215 = smul.addr %s20, 2
          %s216 = smul.addr %s215, 128
          %s217 = scalar_lea.hbm %s2, %s216
          %s218 = sshll.u32 %s208, 4
          %s219 = int_to_ptr.vmem [resolvable:$true] %s218
          %224 = dma.vmem_to_hbm [thread:$0]  %s219, 256, %s217, %s205, 128, 128, 8
        $region36: #{tpu_custom_call.1} parent=27 // pred_fallthru
          _
      $region28: #{tpu_custom_call.1} parent=5 // pred_fallthru
        _
      %p225 = scmp.le.s32.totalorder 2, %s15
      // Predicated region
      $region37: #{tpu_custom_call.1} parent=5 // pred_check
        %p226 = pneg %p225
      $region38: #{tpu_custom_call.1} parent=5 // pred_check_branch
        %228 = sbr.rel (%p226) target = $region40
      $region39: #{tpu_custom_call.1} parent=5 // pred_region
        %s229 = ssub.s32 %s15, 2
        // Predicated region
        $region41: #{tpu_custom_call.1} parent=39 // pred_check
          %p230 = pneg %p91
        $region42: #{tpu_custom_call.1} parent=39 // pred_check_branch
          %232 = sbr.rel (%p230) target = $region44
        $region43: #{tpu_custom_call.1} parent=39 // pred_region
          %s233 = sand.u32 %s76, 1
          %s234 = scalar_lea.sflag [#allocation5], %s233
          %s235 = sand.u32 %s76, 1
          %s236 = smul.addr %s235, 16
          %s237 = scalar_lea.vmem [#allocation6], %s236
          %238 = dma.done %s234, 256
        $region44: #{tpu_custom_call.1} parent=39 // pred_fallthru
          _
      $region40: #{tpu_custom_call.1} parent=5 // pred_fallthru
        _
    $region6: #{tpu_custom_call.1} parent=1 // loop_footer
      %s19 = sadd.s32 1, %s15
    $region7: #{tpu_custom_call.1} parent=1 // loop_footer_branch
      %14 = sbr.rel target = $region3
    $region8: #{tpu_custom_call.1} parent=1 // loop_exit
      _
    %239 = vsyncpa [#allocation4], 1
    %s240 = scalar_lea.sflag [#allocation4], 1
    %241 = vsyncpa %s240, 1
    %242 = vsyncpa [#allocation5], 1
    %s243 = scalar_lea.sflag [#allocation5], 1
    %244 = vsyncpa %s243, 1

</llo_original>
